<compile_context>
chip_gen: v7x
topology: tpu7x:2x2x1
jax: 0.10.0
libtpu: 0.0.40
codegen_flags: <defaults>
</compile_context>

<pallas_src>
import functools

import jax
import jax.numpy as jnp
from jax.experimental import pallas as pl
from jax.experimental.pallas import tpu as pltpu

DIM_INPUT = 5
DIM_HIDDEN = 6
DIM_OUTPUT = 3

LANE = 128  # TPU lane width; batch blocks are multiples of this.


def _round_up(x, m):
    return ((x + m - 1) // m) * m


def controller_kernel(w1_ref, b1_ref, w2_ref, b2_ref, w3_ref, b3_ref,
                      x_ref, o_ref):
    """x_ref: (DIM_INPUT, TB) f32 in VMEM (batch on lanes).
    w*/b* refs: flattened f32 arrays in SMEM (row-major (in, out) weights).
    o_ref: (DIM_OUTPUT, TB) f32 in VMEM.
    """
    x = x_ref[...]                                     # (DIM_INPUT, TB)

    def dense_tanh(in_rows, w_ref, b_ref, n_in, n_out):
        # y[j] = tanh(sum_i in_rows[i] * W[i, j] + b[j]); all rows are (1, TB).
        out_rows = []
        for j in range(n_out):
            acc = in_rows[0] * w_ref[0 * n_out + j]
            for i in range(1, n_in):
                acc = acc + in_rows[i] * w_ref[i * n_out + j]
            out_rows.append(jnp.tanh(acc + b_ref[j]))
        return out_rows

    x_rows = [x[i:i + 1, :] for i in range(DIM_INPUT)]

    h1 = dense_tanh(x_rows, w1_ref, b1_ref, DIM_INPUT, DIM_HIDDEN)   # Tanh
    h2 = dense_tanh(h1, w2_ref, b2_ref, DIM_HIDDEN, DIM_HIDDEN)      # Tanh
    # w3/b3 arrive pre-scaled by 0.5, so tanh here == 2*(sigmoid(z) - 0.5).
    h3 = dense_tanh(h2, w3_ref, b3_ref, DIM_HIDDEN, DIM_OUTPUT)

    o_ref[...] = jnp.concatenate(h3, axis=0)           # (DIM_OUTPUT, TB)


@functools.partial(jax.jit, static_argnames=("block_b",))
def controller_forward(state, params, *, block_b=4096):
    """state: (B, DIM_INPUT) f32. Returns (B, DIM_OUTPUT) f32."""
    B = state.shape[0]

    # Batch block on the lane axis: multiple of 128, no bigger than needed.
    bb = min(_round_up(block_b, LANE), _round_up(B, LANE))
    Bp = _round_up(B, bb)

    # Lane-dense layout: batch -> lanes.
    xt = state.T                                        # (DIM_INPUT, B)
    if Bp != B:
        xt = jnp.pad(xt, ((0, 0), (0, Bp - B)))

    # Flatten weights/biases for SMEM; fold sigmoid->tanh via 0.5 scale on L3.
    w1f = params["w1"].reshape(-1)
    b1f = params["b1"].reshape(-1)
    w2f = params["w2"].reshape(-1)
    b2f = params["b2"].reshape(-1)
    w3f = (0.5 * params["w3"]).reshape(-1)
    b3f = (0.5 * params["b3"]).reshape(-1)

    smem_spec = pl.BlockSpec(memory_space=pltpu.MemorySpace.SMEM)

    out_t = pl.pallas_call(
        controller_kernel,
        out_shape=jax.ShapeDtypeStruct((DIM_OUTPUT, Bp), jnp.float32),
        grid=(pl.cdiv(Bp, bb),),
        in_specs=[
            smem_spec, smem_spec,          # w1, b1
            smem_spec, smem_spec,          # w2, b2
            smem_spec, smem_spec,          # w3, b3 (pre-scaled)
            pl.BlockSpec((DIM_INPUT, bb), lambda i: (0, i)),
        ],
        out_specs=pl.BlockSpec((DIM_OUTPUT, bb), lambda i: (0, i)),
        compiler_params=pltpu.CompilerParams(
            dimension_semantics=("parallel",)),
    )(w1f, b1f, w2f, b2f, w3f, b3f, xt)

    return out_t[:, :B].T                               # (B, DIM_OUTPUT)


def init_params(key):
    """Deterministic init mimicking nn.Linear's uniform(-1/sqrt(fan_in), ...)."""
    ks = jax.random.split(key, 6)

    def linear(kw, kb, fan_in, fan_out):
        bound = 1.0 / jnp.sqrt(float(fan_in))
        # PyTorch stores W as (out, in); we keep the transposed (in, out) form.
        w = jax.random.uniform(kw, (fan_in, fan_out), jnp.float32, -bound, bound)
        b = jax.random.uniform(kb, (1, fan_out), jnp.float32, -bound, bound)
        return w, b

    w1, b1 = linear(ks[0], ks[1], DIM_INPUT, DIM_HIDDEN)
    w2, b2 = linear(ks[2], ks[3], DIM_HIDDEN, DIM_HIDDEN)
    w3, b3 = linear(ks[4], ks[5], DIM_HIDDEN, DIM_OUTPUT)
    return {"w1": w1, "b1": b1, "w2": w2, "b2": b2, "w3": w3, "b3": b3}


def reference_forward(state, params):
    """Pure-JAX reference matching the PyTorch module exactly."""
    h1 = jnp.tanh(state @ params["w1"] + params["b1"])
    h2 = jnp.tanh(h1 @ params["w2"] + params["b2"])
    act = jax.nn.sigmoid(h2 @ params["w3"] + params["b3"])
    return (act - 0.5) * 2.0


if __name__ == "__main__":
    key = jax.random.PRNGKey(0)
    k_param, k_state = jax.random.split(key)

    params = init_params(k_param)
    state = jax.random.normal(k_state, (8, DIM_INPUT), jnp.float32)  # batch=8

    out = jax.block_until_ready(controller_forward(state, params))

    ref = reference_forward(state, params)
    assert out.shape == (8, DIM_OUTPUT)
    assert jnp.allclose(out, ref, atol=1e-5, rtol=1e-5)

    print("KERNEL_OK")
</pallas_src>

<mosaic_0001>
module attributes {stable_mosaic.version = 11 : i64} {
  func.func @controller_kernel(%arg0: i32, %arg1: memref<30xf32, #tpu.memory_space<smem>>, %arg2: memref<6xf32, #tpu.memory_space<smem>>, %arg3: memref<36xf32, #tpu.memory_space<smem>>, %arg4: memref<6xf32, #tpu.memory_space<smem>>, %arg5: memref<18xf32, #tpu.memory_space<smem>>, %arg6: memref<3xf32, #tpu.memory_space<smem>>, %arg7: memref<5x128xf32, #tpu.memory_space<vmem>>, %arg8: memref<3x128xf32, #tpu.memory_space<vmem>>) attributes {dimension_semantics = [#tpu.dimension_semantics<parallel>], iteration_bounds = array<i64: 1>, scalar_prefetch = 0 : i64, scratch_operands = 0 : i64, tpu.core_type = #tpu.core_type<tc>, window_params = [{transform_indices = @transform_0, window_bounds = array<i64: 30>}, {transform_indices = @transform_1, window_bounds = array<i64: 6>}, {transform_indices = @transform_2, window_bounds = array<i64: 36>}, {transform_indices = @transform_3, window_bounds = array<i64: 6>}, {transform_indices = @transform_4, window_bounds = array<i64: 18>}, {transform_indices = @transform_5, window_bounds = array<i64: 3>}, {transform_indices = @transform_6, window_bounds = array<i64: 5, 128>}, {transform_indices = @transform_7, window_bounds = array<i64: 3, 128>}]} {
    %c0 = arith.constant 0 : index
    %c0_0 = arith.constant 0 : index
    %0 = vector.load %arg7[%c0, %c0_0] : memref<5x128xf32, #tpu.memory_space<vmem>>, vector<5x128xf32>
    %1 = vector.extract_strided_slice %0 {offsets = [0, 0], sizes = [1, 128], strides = [1, 1]} : vector<5x128xf32> to vector<1x128xf32>
    %2 = vector.extract_strided_slice %0 {offsets = [1, 0], sizes = [1, 128], strides = [1, 1]} : vector<5x128xf32> to vector<1x128xf32>
    %3 = vector.extract_strided_slice %0 {offsets = [2, 0], sizes = [1, 128], strides = [1, 1]} : vector<5x128xf32> to vector<1x128xf32>
    %4 = vector.extract_strided_slice %0 {offsets = [3, 0], sizes = [1, 128], strides = [1, 1]} : vector<5x128xf32> to vector<1x128xf32>
    %5 = vector.extract_strided_slice %0 {offsets = [4, 0], sizes = [1, 128], strides = [1, 1]} : vector<5x128xf32> to vector<1x128xf32>
    %c0_1 = arith.constant 0 : index
    %6 = memref.load %arg1[%c0_1] : memref<30xf32, #tpu.memory_space<smem>>
    %7 = vector.broadcast %6 : f32 to vector<1x128xf32>
    %8 = arith.mulf %1, %7 : vector<1x128xf32>
    %c6 = arith.constant 6 : index
    %9 = memref.load %arg1[%c6] : memref<30xf32, #tpu.memory_space<smem>>
    %10 = vector.broadcast %9 : f32 to vector<1x128xf32>
    %11 = arith.mulf %2, %10 : vector<1x128xf32>
    %12 = arith.addf %8, %11 : vector<1x128xf32>
    %c12 = arith.constant 12 : index
    %13 = memref.load %arg1[%c12] : memref<30xf32, #tpu.memory_space<smem>>
    %14 = vector.broadcast %13 : f32 to vector<1x128xf32>
    %15 = arith.mulf %3, %14 : vector<1x128xf32>
    %16 = arith.addf %12, %15 : vector<1x128xf32>
    %c18 = arith.constant 18 : index
    %17 = memref.load %arg1[%c18] : memref<30xf32, #tpu.memory_space<smem>>
    %18 = vector.broadcast %17 : f32 to vector<1x128xf32>
    %19 = arith.mulf %4, %18 : vector<1x128xf32>
    %20 = arith.addf %16, %19 : vector<1x128xf32>
    %c24 = arith.constant 24 : index
    %21 = memref.load %arg1[%c24] : memref<30xf32, #tpu.memory_space<smem>>
    %22 = vector.broadcast %21 : f32 to vector<1x128xf32>
    %23 = arith.mulf %5, %22 : vector<1x128xf32>
    %24 = arith.addf %20, %23 : vector<1x128xf32>
    %c0_2 = arith.constant 0 : index
    %25 = memref.load %arg2[%c0_2] : memref<6xf32, #tpu.memory_space<smem>>
    %26 = vector.broadcast %25 : f32 to vector<1x128xf32>
    %27 = arith.addf %24, %26 : vector<1x128xf32>
    %28 = math.tanh %27 : vector<1x128xf32>
    %c1 = arith.constant 1 : index
    %29 = memref.load %arg1[%c1] : memref<30xf32, #tpu.memory_space<smem>>
    %30 = vector.broadcast %29 : f32 to vector<1x128xf32>
    %31 = arith.mulf %1, %30 : vector<1x128xf32>
    %c7 = arith.constant 7 : index
    %32 = memref.load %arg1[%c7] : memref<30xf32, #tpu.memory_space<smem>>
    %33 = vector.broadcast %32 : f32 to vector<1x128xf32>
    %34 = arith.mulf %2, %33 : vector<1x128xf32>
    %35 = arith.addf %31, %34 : vector<1x128xf32>
    %c13 = arith.constant 13 : index
    %36 = memref.load %arg1[%c13] : memref<30xf32, #tpu.memory_space<smem>>
    %37 = vector.broadcast %36 : f32 to vector<1x128xf32>
    %38 = arith.mulf %3, %37 : vector<1x128xf32>
    %39 = arith.addf %35, %38 : vector<1x128xf32>
    %c19 = arith.constant 19 : index
    %40 = memref.load %arg1[%c19] : memref<30xf32, #tpu.memory_space<smem>>
    %41 = vector.broadcast %40 : f32 to vector<1x128xf32>
    %42 = arith.mulf %4, %41 : vector<1x128xf32>
    %43 = arith.addf %39, %42 : vector<1x128xf32>
    %c25 = arith.constant 25 : index
    %44 = memref.load %arg1[%c25] : memref<30xf32, #tpu.memory_space<smem>>
    %45 = vector.broadcast %44 : f32 to vector<1x128xf32>
    %46 = arith.mulf %5, %45 : vector<1x128xf32>
    %47 = arith.addf %43, %46 : vector<1x128xf32>
    %c1_3 = arith.constant 1 : index
    %48 = memref.load %arg2[%c1_3] : memref<6xf32, #tpu.memory_space<smem>>
    %49 = vector.broadcast %48 : f32 to vector<1x128xf32>
    %50 = arith.addf %47, %49 : vector<1x128xf32>
    %51 = math.tanh %50 : vector<1x128xf32>
    %c2 = arith.constant 2 : index
    %52 = memref.load %arg1[%c2] : memref<30xf32, #tpu.memory_space<smem>>
    %53 = vector.broadcast %52 : f32 to vector<1x128xf32>
    %54 = arith.mulf %1, %53 : vector<1x128xf32>
    %c8 = arith.constant 8 : index
    %55 = memref.load %arg1[%c8] : memref<30xf32, #tpu.memory_space<smem>>
    %56 = vector.broadcast %55 : f32 to vector<1x128xf32>
    %57 = arith.mulf %2, %56 : vector<1x128xf32>
    %58 = arith.addf %54, %57 : vector<1x128xf32>
    %c14 = arith.constant 14 : index
    %59 = memref.load %arg1[%c14] : memref<30xf32, #tpu.memory_space<smem>>
    %60 = vector.broadcast %59 : f32 to vector<1x128xf32>
    %61 = arith.mulf %3, %60 : vector<1x128xf32>
    %62 = arith.addf %58, %61 : vector<1x128xf32>
    %c20 = arith.constant 20 : index
    %63 = memref.load %arg1[%c20] : memref<30xf32, #tpu.memory_space<smem>>
    %64 = vector.broadcast %63 : f32 to vector<1x128xf32>
    %65 = arith.mulf %4, %64 : vector<1x128xf32>
    %66 = arith.addf %62, %65 : vector<1x128xf32>
    %c26 = arith.constant 26 : index
    %67 = memref.load %arg1[%c26] : memref<30xf32, #tpu.memory_space<smem>>
    %68 = vector.broadcast %67 : f32 to vector<1x128xf32>
    %69 = arith.mulf %5, %68 : vector<1x128xf32>
    %70 = arith.addf %66, %69 : vector<1x128xf32>
    %c2_4 = arith.constant 2 : index
    %71 = memref.load %arg2[%c2_4] : memref<6xf32, #tpu.memory_space<smem>>
    %72 = vector.broadcast %71 : f32 to vector<1x128xf32>
    %73 = arith.addf %70, %72 : vector<1x128xf32>
    %74 = math.tanh %73 : vector<1x128xf32>
    %c3 = arith.constant 3 : index
    %75 = memref.load %arg1[%c3] : memref<30xf32, #tpu.memory_space<smem>>
    %76 = vector.broadcast %75 : f32 to vector<1x128xf32>
    %77 = arith.mulf %1, %76 : vector<1x128xf32>
    %c9 = arith.constant 9 : index
    %78 = memref.load %arg1[%c9] : memref<30xf32, #tpu.memory_space<smem>>
    %79 = vector.broadcast %78 : f32 to vector<1x128xf32>
    %80 = arith.mulf %2, %79 : vector<1x128xf32>
    %81 = arith.addf %77, %80 : vector<1x128xf32>
    %c15 = arith.constant 15 : index
    %82 = memref.load %arg1[%c15] : memref<30xf32, #tpu.memory_space<smem>>
    %83 = vector.broadcast %82 : f32 to vector<1x128xf32>
    %84 = arith.mulf %3, %83 : vector<1x128xf32>
    %85 = arith.addf %81, %84 : vector<1x128xf32>
    %c21 = arith.constant 21 : index
    %86 = memref.load %arg1[%c21] : memref<30xf32, #tpu.memory_space<smem>>
    %87 = vector.broadcast %86 : f32 to vector<1x128xf32>
    %88 = arith.mulf %4, %87 : vector<1x128xf32>
    %89 = arith.addf %85, %88 : vector<1x128xf32>
    %c27 = arith.constant 27 : index
    %90 = memref.load %arg1[%c27] : memref<30xf32, #tpu.memory_space<smem>>
    %91 = vector.broadcast %90 : f32 to vector<1x128xf32>
    %92 = arith.mulf %5, %91 : vector<1x128xf32>
    %93 = arith.addf %89, %92 : vector<1x128xf32>
    %c3_5 = arith.constant 3 : index
    %94 = memref.load %arg2[%c3_5] : memref<6xf32, #tpu.memory_space<smem>>
    %95 = vector.broadcast %94 : f32 to vector<1x128xf32>
    %96 = arith.addf %93, %95 : vector<1x128xf32>
    %97 = math.tanh %96 : vector<1x128xf32>
    %c4 = arith.constant 4 : index
    %98 = memref.load %arg1[%c4] : memref<30xf32, #tpu.memory_space<smem>>
    %99 = vector.broadcast %98 : f32 to vector<1x128xf32>
    %100 = arith.mulf %1, %99 : vector<1x128xf32>
    %c10 = arith.constant 10 : index
    %101 = memref.load %arg1[%c10] : memref<30xf32, #tpu.memory_space<smem>>
    %102 = vector.broadcast %101 : f32 to vector<1x128xf32>
    %103 = arith.mulf %2, %102 : vector<1x128xf32>
    %104 = arith.addf %100, %103 : vector<1x128xf32>
    %c16 = arith.constant 16 : index
    %105 = memref.load %arg1[%c16] : memref<30xf32, #tpu.memory_space<smem>>
    %106 = vector.broadcast %105 : f32 to vector<1x128xf32>
    %107 = arith.mulf %3, %106 : vector<1x128xf32>
    %108 = arith.addf %104, %107 : vector<1x128xf32>
    %c22 = arith.constant 22 : index
    %109 = memref.load %arg1[%c22] : memref<30xf32, #tpu.memory_space<smem>>
    %110 = vector.broadcast %109 : f32 to vector<1x128xf32>
    %111 = arith.mulf %4, %110 : vector<1x128xf32>
    %112 = arith.addf %108, %111 : vector<1x128xf32>
    %c28 = arith.constant 28 : index
    %113 = memref.load %arg1[%c28] : memref<30xf32, #tpu.memory_space<smem>>
    %114 = vector.broadcast %113 : f32 to vector<1x128xf32>
    %115 = arith.mulf %5, %114 : vector<1x128xf32>
    %116 = arith.addf %112, %115 : vector<1x128xf32>
    %c4_6 = arith.constant 4 : index
    %117 = memref.load %arg2[%c4_6] : memref<6xf32, #tpu.memory_space<smem>>
    %118 = vector.broadcast %117 : f32 to vector<1x128xf32>
    %119 = arith.addf %116, %118 : vector<1x128xf32>
    %120 = math.tanh %119 : vector<1x128xf32>
    %c5 = arith.constant 5 : index
    %121 = memref.load %arg1[%c5] : memref<30xf32, #tpu.memory_space<smem>>
    %122 = vector.broadcast %121 : f32 to vector<1x128xf32>
    %123 = arith.mulf %1, %122 : vector<1x128xf32>
    %c11 = arith.constant 11 : index
    %124 = memref.load %arg1[%c11] : memref<30xf32, #tpu.memory_space<smem>>
    %125 = vector.broadcast %124 : f32 to vector<1x128xf32>
    %126 = arith.mulf %2, %125 : vector<1x128xf32>
    %127 = arith.addf %123, %126 : vector<1x128xf32>
    %c17 = arith.constant 17 : index
    %128 = memref.load %arg1[%c17] : memref<30xf32, #tpu.memory_space<smem>>
    %129 = vector.broadcast %128 : f32 to vector<1x128xf32>
    %130 = arith.mulf %3, %129 : vector<1x128xf32>
    %131 = arith.addf %127, %130 : vector<1x128xf32>
    %c23 = arith.constant 23 : index
    %132 = memref.load %arg1[%c23] : memref<30xf32, #tpu.memory_space<smem>>
    %133 = vector.broadcast %132 : f32 to vector<1x128xf32>
    %134 = arith.mulf %4, %133 : vector<1x128xf32>
    %135 = arith.addf %131, %134 : vector<1x128xf32>
    %c29 = arith.constant 29 : index
    %136 = memref.load %arg1[%c29] : memref<30xf32, #tpu.memory_space<smem>>
    %137 = vector.broadcast %136 : f32 to vector<1x128xf32>
    %138 = arith.mulf %5, %137 : vector<1x128xf32>
    %139 = arith.addf %135, %138 : vector<1x128xf32>
    %c5_7 = arith.constant 5 : index
    %140 = memref.load %arg2[%c5_7] : memref<6xf32, #tpu.memory_space<smem>>
    %141 = vector.broadcast %140 : f32 to vector<1x128xf32>
    %142 = arith.addf %139, %141 : vector<1x128xf32>
    %143 = math.tanh %142 : vector<1x128xf32>
    %c0_8 = arith.constant 0 : index
    %144 = memref.load %arg3[%c0_8] : memref<36xf32, #tpu.memory_space<smem>>
    %145 = vector.broadcast %144 : f32 to vector<1x128xf32>
    %146 = arith.mulf %28, %145 : vector<1x128xf32>
    %c6_9 = arith.constant 6 : index
    %147 = memref.load %arg3[%c6_9] : memref<36xf32, #tpu.memory_space<smem>>
    %148 = vector.broadcast %147 : f32 to vector<1x128xf32>
    %149 = arith.mulf %51, %148 : vector<1x128xf32>
    %150 = arith.addf %146, %149 : vector<1x128xf32>
    %c12_10 = arith.constant 12 : index
    %151 = memref.load %arg3[%c12_10] : memref<36xf32, #tpu.memory_space<smem>>
    %152 = vector.broadcast %151 : f32 to vector<1x128xf32>
    %153 = arith.mulf %74, %152 : vector<1x128xf32>
    %154 = arith.addf %150, %153 : vector<1x128xf32>
    %c18_11 = arith.constant 18 : index
    %155 = memref.load %arg3[%c18_11] : memref<36xf32, #tpu.memory_space<smem>>
    %156 = vector.broadcast %155 : f32 to vector<1x128xf32>
    %157 = arith.mulf %97, %156 : vector<1x128xf32>
    %158 = arith.addf %154, %157 : vector<1x128xf32>
    %c24_12 = arith.constant 24 : index
    %159 = memref.load %arg3[%c24_12] : memref<36xf32, #tpu.memory_space<smem>>
    %160 = vector.broadcast %159 : f32 to vector<1x128xf32>
    %161 = arith.mulf %120, %160 : vector<1x128xf32>
    %162 = arith.addf %158, %161 : vector<1x128xf32>
    %c30 = arith.constant 30 : index
    %163 = memref.load %arg3[%c30] : memref<36xf32, #tpu.memory_space<smem>>
    %164 = vector.broadcast %163 : f32 to vector<1x128xf32>
    %165 = arith.mulf %143, %164 : vector<1x128xf32>
    %166 = arith.addf %162, %165 : vector<1x128xf32>
    %c0_13 = arith.constant 0 : index
    %167 = memref.load %arg4[%c0_13] : memref<6xf32, #tpu.memory_space<smem>>
    %168 = vector.broadcast %167 : f32 to vector<1x128xf32>
    %169 = arith.addf %166, %168 : vector<1x128xf32>
    %170 = math.tanh %169 : vector<1x128xf32>
    %c1_14 = arith.constant 1 : index
    %171 = memref.load %arg3[%c1_14] : memref<36xf32, #tpu.memory_space<smem>>
    %172 = vector.broadcast %171 : f32 to vector<1x128xf32>
    %173 = arith.mulf %28, %172 : vector<1x128xf32>
    %c7_15 = arith.constant 7 : index
    %174 = memref.load %arg3[%c7_15] : memref<36xf32, #tpu.memory_space<smem>>
    %175 = vector.broadcast %174 : f32 to vector<1x128xf32>
    %176 = arith.mulf %51, %175 : vector<1x128xf32>
    %177 = arith.addf %173, %176 : vector<1x128xf32>
    %c13_16 = arith.constant 13 : index
    %178 = memref.load %arg3[%c13_16] : memref<36xf32, #tpu.memory_space<smem>>
    %179 = vector.broadcast %178 : f32 to vector<1x128xf32>
    %180 = arith.mulf %74, %179 : vector<1x128xf32>
    %181 = arith.addf %177, %180 : vector<1x128xf32>
    %c19_17 = arith.constant 19 : index
    %182 = memref.load %arg3[%c19_17] : memref<36xf32, #tpu.memory_space<smem>>
    %183 = vector.broadcast %182 : f32 to vector<1x128xf32>
    %184 = arith.mulf %97, %183 : vector<1x128xf32>
    %185 = arith.addf %181, %184 : vector<1x128xf32>
    %c25_18 = arith.constant 25 : index
    %186 = memref.load %arg3[%c25_18] : memref<36xf32, #tpu.memory_space<smem>>
    %187 = vector.broadcast %186 : f32 to vector<1x128xf32>
    %188 = arith.mulf %120, %187 : vector<1x128xf32>
    %189 = arith.addf %185, %188 : vector<1x128xf32>
    %c31 = arith.constant 31 : index
    %190 = memref.load %arg3[%c31] : memref<36xf32, #tpu.memory_space<smem>>
    %191 = vector.broadcast %190 : f32 to vector<1x128xf32>
    %192 = arith.mulf %143, %191 : vector<1x128xf32>
    %193 = arith.addf %189, %192 : vector<1x128xf32>
    %c1_19 = arith.constant 1 : index
    %194 = memref.load %arg4[%c1_19] : memref<6xf32, #tpu.memory_space<smem>>
    %195 = vector.broadcast %194 : f32 to vector<1x128xf32>
    %196 = arith.addf %193, %195 : vector<1x128xf32>
    %197 = math.tanh %196 : vector<1x128xf32>
    %c2_20 = arith.constant 2 : index
    %198 = memref.load %arg3[%c2_20] : memref<36xf32, #tpu.memory_space<smem>>
    %199 = vector.broadcast %198 : f32 to vector<1x128xf32>
    %200 = arith.mulf %28, %199 : vector<1x128xf32>
    %c8_21 = arith.constant 8 : index
    %201 = memref.load %arg3[%c8_21] : memref<36xf32, #tpu.memory_space<smem>>
    %202 = vector.broadcast %201 : f32 to vector<1x128xf32>
    %203 = arith.mulf %51, %202 : vector<1x128xf32>
    %204 = arith.addf %200, %203 : vector<1x128xf32>
    %c14_22 = arith.constant 14 : index
    %205 = memref.load %arg3[%c14_22] : memref<36xf32, #tpu.memory_space<smem>>
    %206 = vector.broadcast %205 : f32 to vector<1x128xf32>
    %207 = arith.mulf %74, %206 : vector<1x128xf32>
    %208 = arith.addf %204, %207 : vector<1x128xf32>
    %c20_23 = arith.constant 20 : index
    %209 = memref.load %arg3[%c20_23] : memref<36xf32, #tpu.memory_space<smem>>
    %210 = vector.broadcast %209 : f32 to vector<1x128xf32>
    %211 = arith.mulf %97, %210 : vector<1x128xf32>
    %212 = arith.addf %208, %211 : vector<1x128xf32>
    %c26_24 = arith.constant 26 : index
    %213 = memref.load %arg3[%c26_24] : memref<36xf32, #tpu.memory_space<smem>>
    %214 = vector.broadcast %213 : f32 to vector<1x128xf32>
    %215 = arith.mulf %120, %214 : vector<1x128xf32>
    %216 = arith.addf %212, %215 : vector<1x128xf32>
    %c32 = arith.constant 32 : index
    %217 = memref.load %arg3[%c32] : memref<36xf32, #tpu.memory_space<smem>>
    %218 = vector.broadcast %217 : f32 to vector<1x128xf32>
    %219 = arith.mulf %143, %218 : vector<1x128xf32>
    %220 = arith.addf %216, %219 : vector<1x128xf32>
    %c2_25 = arith.constant 2 : index
    %221 = memref.load %arg4[%c2_25] : memref<6xf32, #tpu.memory_space<smem>>
    %222 = vector.broadcast %221 : f32 to vector<1x128xf32>
    %223 = arith.addf %220, %222 : vector<1x128xf32>
    %224 = math.tanh %223 : vector<1x128xf32>
    %c3_26 = arith.constant 3 : index
    %225 = memref.load %arg3[%c3_26] : memref<36xf32, #tpu.memory_space<smem>>
    %226 = vector.broadcast %225 : f32 to vector<1x128xf32>
    %227 = arith.mulf %28, %226 : vector<1x128xf32>
    %c9_27 = arith.constant 9 : index
    %228 = memref.load %arg3[%c9_27] : memref<36xf32, #tpu.memory_space<smem>>
    %229 = vector.broadcast %228 : f32 to vector<1x128xf32>
    %230 = arith.mulf %51, %229 : vector<1x128xf32>
    %231 = arith.addf %227, %230 : vector<1x128xf32>
    %c15_28 = arith.constant 15 : index
    %232 = memref.load %arg3[%c15_28] : memref<36xf32, #tpu.memory_space<smem>>
    %233 = vector.broadcast %232 : f32 to vector<1x128xf32>
    %234 = arith.mulf %74, %233 : vector<1x128xf32>
    %235 = arith.addf %231, %234 : vector<1x128xf32>
    %c21_29 = arith.constant 21 : index
    %236 = memref.load %arg3[%c21_29] : memref<36xf32, #tpu.memory_space<smem>>
    %237 = vector.broadcast %236 : f32 to vector<1x128xf32>
    %238 = arith.mulf %97, %237 : vector<1x128xf32>
    %239 = arith.addf %235, %238 : vector<1x128xf32>
    %c27_30 = arith.constant 27 : index
    %240 = memref.load %arg3[%c27_30] : memref<36xf32, #tpu.memory_space<smem>>
    %241 = vector.broadcast %240 : f32 to vector<1x128xf32>
    %242 = arith.mulf %120, %241 : vector<1x128xf32>
    %243 = arith.addf %239, %242 : vector<1x128xf32>
    %c33 = arith.constant 33 : index
    %244 = memref.load %arg3[%c33] : memref<36xf32, #tpu.memory_space<smem>>
    %245 = vector.broadcast %244 : f32 to vector<1x128xf32>
    %246 = arith.mulf %143, %245 : vector<1x128xf32>
    %247 = arith.addf %243, %246 : vector<1x128xf32>
    %c3_31 = arith.constant 3 : index
    %248 = memref.load %arg4[%c3_31] : memref<6xf32, #tpu.memory_space<smem>>
    %249 = vector.broadcast %248 : f32 to vector<1x128xf32>
    %250 = arith.addf %247, %249 : vector<1x128xf32>
    %251 = math.tanh %250 : vector<1x128xf32>
    %c4_32 = arith.constant 4 : index
    %252 = memref.load %arg3[%c4_32] : memref<36xf32, #tpu.memory_space<smem>>
    %253 = vector.broadcast %252 : f32 to vector<1x128xf32>
    %254 = arith.mulf %28, %253 : vector<1x128xf32>
    %c10_33 = arith.constant 10 : index
    %255 = memref.load %arg3[%c10_33] : memref<36xf32, #tpu.memory_space<smem>>
    %256 = vector.broadcast %255 : f32 to vector<1x128xf32>
    %257 = arith.mulf %51, %256 : vector<1x128xf32>
    %258 = arith.addf %254, %257 : vector<1x128xf32>
    %c16_34 = arith.constant 16 : index
    %259 = memref.load %arg3[%c16_34] : memref<36xf32, #tpu.memory_space<smem>>
    %260 = vector.broadcast %259 : f32 to vector<1x128xf32>
    %261 = arith.mulf %74, %260 : vector<1x128xf32>
    %262 = arith.addf %258, %261 : vector<1x128xf32>
    %c22_35 = arith.constant 22 : index
    %263 = memref.load %arg3[%c22_35] : memref<36xf32, #tpu.memory_space<smem>>
    %264 = vector.broadcast %263 : f32 to vector<1x128xf32>
    %265 = arith.mulf %97, %264 : vector<1x128xf32>
    %266 = arith.addf %262, %265 : vector<1x128xf32>
    %c28_36 = arith.constant 28 : index
    %267 = memref.load %arg3[%c28_36] : memref<36xf32, #tpu.memory_space<smem>>
    %268 = vector.broadcast %267 : f32 to vector<1x128xf32>
    %269 = arith.mulf %120, %268 : vector<1x128xf32>
    %270 = arith.addf %266, %269 : vector<1x128xf32>
    %c34 = arith.constant 34 : index
    %271 = memref.load %arg3[%c34] : memref<36xf32, #tpu.memory_space<smem>>
    %272 = vector.broadcast %271 : f32 to vector<1x128xf32>
    %273 = arith.mulf %143, %272 : vector<1x128xf32>
    %274 = arith.addf %270, %273 : vector<1x128xf32>
    %c4_37 = arith.constant 4 : index
    %275 = memref.load %arg4[%c4_37] : memref<6xf32, #tpu.memory_space<smem>>
    %276 = vector.broadcast %275 : f32 to vector<1x128xf32>
    %277 = arith.addf %274, %276 : vector<1x128xf32>
    %278 = math.tanh %277 : vector<1x128xf32>
    %c5_38 = arith.constant 5 : index
    %279 = memref.load %arg3[%c5_38] : memref<36xf32, #tpu.memory_space<smem>>
    %280 = vector.broadcast %279 : f32 to vector<1x128xf32>
    %281 = arith.mulf %28, %280 : vector<1x128xf32>
    %c11_39 = arith.constant 11 : index
    %282 = memref.load %arg3[%c11_39] : memref<36xf32, #tpu.memory_space<smem>>
    %283 = vector.broadcast %282 : f32 to vector<1x128xf32>
    %284 = arith.mulf %51, %283 : vector<1x128xf32>
    %285 = arith.addf %281, %284 : vector<1x128xf32>
    %c17_40 = arith.constant 17 : index
    %286 = memref.load %arg3[%c17_40] : memref<36xf32, #tpu.memory_space<smem>>
    %287 = vector.broadcast %286 : f32 to vector<1x128xf32>
    %288 = arith.mulf %74, %287 : vector<1x128xf32>
    %289 = arith.addf %285, %288 : vector<1x128xf32>
    %c23_41 = arith.constant 23 : index
    %290 = memref.load %arg3[%c23_41] : memref<36xf32, #tpu.memory_space<smem>>
    %291 = vector.broadcast %290 : f32 to vector<1x128xf32>
    %292 = arith.mulf %97, %291 : vector<1x128xf32>
    %293 = arith.addf %289, %292 : vector<1x128xf32>
    %c29_42 = arith.constant 29 : index
    %294 = memref.load %arg3[%c29_42] : memref<36xf32, #tpu.memory_space<smem>>
    %295 = vector.broadcast %294 : f32 to vector<1x128xf32>
    %296 = arith.mulf %120, %295 : vector<1x128xf32>
    %297 = arith.addf %293, %296 : vector<1x128xf32>
    %c35 = arith.constant 35 : index
    %298 = memref.load %arg3[%c35] : memref<36xf32, #tpu.memory_space<smem>>
    %299 = vector.broadcast %298 : f32 to vector<1x128xf32>
    %300 = arith.mulf %143, %299 : vector<1x128xf32>
    %301 = arith.addf %297, %300 : vector<1x128xf32>
    %c5_43 = arith.constant 5 : index
    %302 = memref.load %arg4[%c5_43] : memref<6xf32, #tpu.memory_space<smem>>
    %303 = vector.broadcast %302 : f32 to vector<1x128xf32>
    %304 = arith.addf %301, %303 : vector<1x128xf32>
    %305 = math.tanh %304 : vector<1x128xf32>
    %c0_44 = arith.constant 0 : index
    %306 = memref.load %arg5[%c0_44] : memref<18xf32, #tpu.memory_space<smem>>
    %307 = vector.broadcast %306 : f32 to vector<1x128xf32>
    %308 = arith.mulf %170, %307 : vector<1x128xf32>
    %c3_45 = arith.constant 3 : index
    %309 = memref.load %arg5[%c3_45] : memref<18xf32, #tpu.memory_space<smem>>
    %310 = vector.broadcast %309 : f32 to vector<1x128xf32>
    %311 = arith.mulf %197, %310 : vector<1x128xf32>
    %312 = arith.addf %308, %311 : vector<1x128xf32>
    %c6_46 = arith.constant 6 : index
    %313 = memref.load %arg5[%c6_46] : memref<18xf32, #tpu.memory_space<smem>>
    %314 = vector.broadcast %313 : f32 to vector<1x128xf32>
    %315 = arith.mulf %224, %314 : vector<1x128xf32>
    %316 = arith.addf %312, %315 : vector<1x128xf32>
    %c9_47 = arith.constant 9 : index
    %317 = memref.load %arg5[%c9_47] : memref<18xf32, #tpu.memory_space<smem>>
    %318 = vector.broadcast %317 : f32 to vector<1x128xf32>
    %319 = arith.mulf %251, %318 : vector<1x128xf32>
    %320 = arith.addf %316, %319 : vector<1x128xf32>
    %c12_48 = arith.constant 12 : index
    %321 = memref.load %arg5[%c12_48] : memref<18xf32, #tpu.memory_space<smem>>
    %322 = vector.broadcast %321 : f32 to vector<1x128xf32>
    %323 = arith.mulf %278, %322 : vector<1x128xf32>
    %324 = arith.addf %320, %323 : vector<1x128xf32>
    %c15_49 = arith.constant 15 : index
    %325 = memref.load %arg5[%c15_49] : memref<18xf32, #tpu.memory_space<smem>>
    %326 = vector.broadcast %325 : f32 to vector<1x128xf32>
    %327 = arith.mulf %305, %326 : vector<1x128xf32>
    %328 = arith.addf %324, %327 : vector<1x128xf32>
    %c0_50 = arith.constant 0 : index
    %329 = memref.load %arg6[%c0_50] : memref<3xf32, #tpu.memory_space<smem>>
    %330 = vector.broadcast %329 : f32 to vector<1x128xf32>
    %331 = arith.addf %328, %330 : vector<1x128xf32>
    %332 = math.tanh %331 : vector<1x128xf32>
    %c1_51 = arith.constant 1 : index
    %333 = memref.load %arg5[%c1_51] : memref<18xf32, #tpu.memory_space<smem>>
    %334 = vector.broadcast %333 : f32 to vector<1x128xf32>
    %335 = arith.mulf %170, %334 : vector<1x128xf32>
    %c4_52 = arith.constant 4 : index
    %336 = memref.load %arg5[%c4_52] : memref<18xf32, #tpu.memory_space<smem>>
    %337 = vector.broadcast %336 : f32 to vector<1x128xf32>
    %338 = arith.mulf %197, %337 : vector<1x128xf32>
    %339 = arith.addf %335, %338 : vector<1x128xf32>
    %c7_53 = arith.constant 7 : index
    %340 = memref.load %arg5[%c7_53] : memref<18xf32, #tpu.memory_space<smem>>
    %341 = vector.broadcast %340 : f32 to vector<1x128xf32>
    %342 = arith.mulf %224, %341 : vector<1x128xf32>
    %343 = arith.addf %339, %342 : vector<1x128xf32>
    %c10_54 = arith.constant 10 : index
    %344 = memref.load %arg5[%c10_54] : memref<18xf32, #tpu.memory_space<smem>>
    %345 = vector.broadcast %344 : f32 to vector<1x128xf32>
    %346 = arith.mulf %251, %345 : vector<1x128xf32>
    %347 = arith.addf %343, %346 : vector<1x128xf32>
    %c13_55 = arith.constant 13 : index
    %348 = memref.load %arg5[%c13_55] : memref<18xf32, #tpu.memory_space<smem>>
    %349 = vector.broadcast %348 : f32 to vector<1x128xf32>
    %350 = arith.mulf %278, %349 : vector<1x128xf32>
    %351 = arith.addf %347, %350 : vector<1x128xf32>
    %c16_56 = arith.constant 16 : index
    %352 = memref.load %arg5[%c16_56] : memref<18xf32, #tpu.memory_space<smem>>
    %353 = vector.broadcast %352 : f32 to vector<1x128xf32>
    %354 = arith.mulf %305, %353 : vector<1x128xf32>
    %355 = arith.addf %351, %354 : vector<1x128xf32>
    %c1_57 = arith.constant 1 : index
    %356 = memref.load %arg6[%c1_57] : memref<3xf32, #tpu.memory_space<smem>>
    %357 = vector.broadcast %356 : f32 to vector<1x128xf32>
    %358 = arith.addf %355, %357 : vector<1x128xf32>
    %359 = math.tanh %358 : vector<1x128xf32>
    %c2_58 = arith.constant 2 : index
    %360 = memref.load %arg5[%c2_58] : memref<18xf32, #tpu.memory_space<smem>>
    %361 = vector.broadcast %360 : f32 to vector<1x128xf32>
    %362 = arith.mulf %170, %361 : vector<1x128xf32>
    %c5_59 = arith.constant 5 : index
    %363 = memref.load %arg5[%c5_59] : memref<18xf32, #tpu.memory_space<smem>>
    %364 = vector.broadcast %363 : f32 to vector<1x128xf32>
    %365 = arith.mulf %197, %364 : vector<1x128xf32>
    %366 = arith.addf %362, %365 : vector<1x128xf32>
    %c8_60 = arith.constant 8 : index
    %367 = memref.load %arg5[%c8_60] : memref<18xf32, #tpu.memory_space<smem>>
    %368 = vector.broadcast %367 : f32 to vector<1x128xf32>
    %369 = arith.mulf %224, %368 : vector<1x128xf32>
    %370 = arith.addf %366, %369 : vector<1x128xf32>
    %c11_61 = arith.constant 11 : index
    %371 = memref.load %arg5[%c11_61] : memref<18xf32, #tpu.memory_space<smem>>
    %372 = vector.broadcast %371 : f32 to vector<1x128xf32>
    %373 = arith.mulf %251, %372 : vector<1x128xf32>
    %374 = arith.addf %370, %373 : vector<1x128xf32>
    %c14_62 = arith.constant 14 : index
    %375 = memref.load %arg5[%c14_62] : memref<18xf32, #tpu.memory_space<smem>>
    %376 = vector.broadcast %375 : f32 to vector<1x128xf32>
    %377 = arith.mulf %278, %376 : vector<1x128xf32>
    %378 = arith.addf %374, %377 : vector<1x128xf32>
    %c17_63 = arith.constant 17 : index
    %379 = memref.load %arg5[%c17_63] : memref<18xf32, #tpu.memory_space<smem>>
    %380 = vector.broadcast %379 : f32 to vector<1x128xf32>
    %381 = arith.mulf %305, %380 : vector<1x128xf32>
    %382 = arith.addf %378, %381 : vector<1x128xf32>
    %c2_64 = arith.constant 2 : index
    %383 = memref.load %arg6[%c2_64] : memref<3xf32, #tpu.memory_space<smem>>
    %384 = vector.broadcast %383 : f32 to vector<1x128xf32>
    %385 = arith.addf %382, %384 : vector<1x128xf32>
    %386 = math.tanh %385 : vector<1x128xf32>
    %387 = tpu.concatenate %332, %359, %386 in 0 : vector<1x128xf32>, vector<1x128xf32>, vector<1x128xf32> -> vector<3x128xf32>
    %c0_65 = arith.constant 0 : index
    %c0_66 = arith.constant 0 : index
    %388 = vector.load %arg8[%c0_65, %c0_66] : memref<3x128xf32, #tpu.memory_space<vmem>>, vector<3x128xf32>
    tpu.vector_store %arg8[%c0_65, %c0_66], %387 {strides = array<i32>} : memref<3x128xf32, #tpu.memory_space<vmem>>, vector<3x128xf32>,
    return
  }
  func.func @transform_0(%arg0: i32) -> i32 {
    %c0_i32 = arith.constant 0 : i32
    %c0_i32_0 = arith.constant 0 : i32
    return %c0_i32 : i32
  }
  func.func @transform_1(%arg0: i32) -> i32 {
    %c0_i32 = arith.constant 0 : i32
    %c0_i32_0 = arith.constant 0 : i32
    return %c0_i32 : i32
  }
  func.func @transform_2(%arg0: i32) -> i32 {
    %c0_i32 = arith.constant 0 : i32
    %c0_i32_0 = arith.constant 0 : i32
    return %c0_i32 : i32
  }
  func.func @transform_3(%arg0: i32) -> i32 {
    %c0_i32 = arith.constant 0 : i32
    %c0_i32_0 = arith.constant 0 : i32
    return %c0_i32 : i32
  }
  func.func @transform_4(%arg0: i32) -> i32 {
    %c0_i32 = arith.constant 0 : i32
    %c0_i32_0 = arith.constant 0 : i32
    return %c0_i32 : i32
  }
  func.func @transform_5(%arg0: i32) -> i32 {
    %c0_i32 = arith.constant 0 : i32
    %c0_i32_0 = arith.constant 0 : i32
    return %c0_i32 : i32
  }
  func.func @transform_6(%arg0: i32) -> (i32, i32) {
    %c0_i32 = arith.constant 0 : i32
    %c0_i32_0 = arith.constant 0 : i32
    return %c0_i32, %arg0 : i32, i32
  }
  func.func @transform_7(%arg0: i32) -> (i32, i32) {
    %c0_i32 = arith.constant 0 : i32
    %c0_i32_0 = arith.constant 0 : i32
    return %c0_i32, %arg0 : i32, i32
  }
}

</mosaic_0001>

<llo_original>
// kernel: controller_forward.1
$region0: #{controller_forward.1}
  #allocation0 [shape = 'u32[]', space=smem, size = 0x4, offset = 0x4, fixed_abs, tag = 'smem constant byte address 0x4 - core index']
  #allocation1 [shape = 'u32[144,128]{1,0:T(1,128)}', space=vmem, size = 0x12000, scoped, tag = 'internal scratch']
  %s0 = inlined_call_operand.vmem [shape: f32[30], index: 0, kind: input, shape index: {}]
  %s1 = inlined_call_operand.vmem [shape: f32[6], index: 1, kind: input, shape index: {}]
  %s2 = inlined_call_operand.vmem [shape: f32[36], index: 2, kind: input, shape index: {}]
  %s3 = inlined_call_operand.vmem [shape: f32[6], index: 3, kind: input, shape index: {}]
  %s4 = inlined_call_operand.vmem [shape: f32[18], index: 4, kind: input, shape index: {}]
  %s5 = inlined_call_operand.vmem [shape: f32[3], index: 5, kind: input, shape index: {}]
  %s6 = inlined_call_operand.vmem [shape: f32[5,128], index: 6, kind: input, shape index: {}]
  %s7 = inlined_call_operand.vmem [shape: f32[3,128], index: 7, kind: output, shape index: {}]
  %s8 = sld [smem:[#allocation0]]
  $region62: #{controller_forward.1} parent=0
    _
  %s10 = ssub.s32 1, %s8
  %s11 = scalar_select 0, %s10, %s8
  $region1: #{controller_forward.1} parent=0
    #allocation2 [shape = 'u8[512]{0}', space=smem, size = 0x200, scoped, tag = 'input window, operand 0, single buffered']
    #allocation3 [shape = 's32[1]{0}', space=sflag, size = 0x4, scoped, tag = 'scoped memory for controller_forward.1']
    #allocation4 [shape = 'u8[512]{0}', space=smem, size = 0x200, scoped, tag = 'input window, operand 1, single buffered']
    #allocation5 [shape = 's32[1]{0}', space=sflag, size = 0x4, scoped, tag = 'scoped memory for controller_forward.1']
    #allocation6 [shape = 'u8[512]{0}', space=smem, size = 0x200, scoped, tag = 'input window, operand 2, single buffered']
    #allocation7 [shape = 'u8[512]{0}', space=smem, size = 0x200, scoped, tag = 'input window, operand 3, single buffered']
    #allocation8 [shape = 's32[1]{0}', space=sflag, size = 0x4, scoped, tag = 'scoped memory for controller_forward.1']
    #allocation9 [shape = 'u8[512]{0}', space=smem, size = 0x200, scoped, tag = 'input window, operand 4, single buffered']
    #allocation10 [shape = 'u8[512]{0}', space=smem, size = 0x200, scoped, tag = 'input window, operand 5, single buffered']
    #allocation11 [shape = 's32[1]{0}', space=sflag, size = 0x4, scoped, tag = 'scoped memory for controller_forward.1']
    %12 = vsyncpa [#allocation3], 0
    %13 = vsyncpa [#allocation5], 0
    %14 = vsyncpa [#allocation8], 0
    %15 = vsyncpa [#allocation11], 0
    // Predicated region
    $region2: #{controller_forward.1} parent=1 // pred_check
      _
    $region3: #{controller_forward.1} parent=1 // pred_check_branch
      %17 = sbr.rel (0) target = $region5
    $region4: #{controller_forward.1} parent=1 // pred_region
      %s19 = ssub.s32 16, 16
      %20 = vsyncadd [#allocation3], %s19
      %s22 = sshll.u32 %s0, 4
      %s23 = int_to_ptr.vmem [resolvable:$true] %s22
      %25 = dma.vmem_to_smem %s23, 16, [#allocation2], [#allocation3]
    $region5: #{controller_forward.1} parent=1 // pred_fallthru
      _
    // Predicated region
    $region6: #{controller_forward.1} parent=1 // pred_check
      _
    $region7: #{controller_forward.1} parent=1 // pred_check_branch
      %27 = sbr.rel (0) target = $region9
    $region8: #{controller_forward.1} parent=1 // pred_region
      %s29 = ssub.s32 16, 16
      %30 = vsyncadd [#allocation5], %s29
      %s32 = sshll.u32 %s1, 4
      %s33 = int_to_ptr.vmem [resolvable:$true] %s32
      %35 = dma.vmem_to_smem %s33, 16, [#allocation4], [#allocation5]
    $region9: #{controller_forward.1} parent=1 // pred_fallthru
      _
    // Predicated region
    $region10: #{controller_forward.1} parent=1 // pred_check
      _
    $region11: #{controller_forward.1} parent=1 // pred_check_branch
      %37 = sbr.rel (0) target = $region13
    $region12: #{controller_forward.1} parent=1 // pred_region
      %s39 = ssub.s32 16, 16
      %40 = vsyncadd [#allocation5], %s39
      %s42 = sshll.u32 %s2, 4
      %s43 = int_to_ptr.vmem [resolvable:$true] %s42
      %45 = dma.vmem_to_smem %s43, 16, [#allocation6], [#allocation5]
    $region13: #{controller_forward.1} parent=1 // pred_fallthru
      _
    // Predicated region
    $region14: #{controller_forward.1} parent=1 // pred_check
      _
    $region15: #{controller_forward.1} parent=1 // pred_check_branch
      %47 = sbr.rel (0) target = $region17
    $region16: #{controller_forward.1} parent=1 // pred_region
      %s49 = ssub.s32 16, 16
      %50 = vsyncadd [#allocation8], %s49
      %s52 = sshll.u32 %s3, 4
      %s53 = int_to_ptr.vmem [resolvable:$true] %s52
      %55 = dma.vmem_to_smem %s53, 16, [#allocation7], [#allocation8]
    $region17: #{controller_forward.1} parent=1 // pred_fallthru
      _
    // Predicated region
    $region18: #{controller_forward.1} parent=1 // pred_check
      _
    $region19: #{controller_forward.1} parent=1 // pred_check_branch
      %57 = sbr.rel (0) target = $region21
    $region20: #{controller_forward.1} parent=1 // pred_region
      %s59 = ssub.s32 16, 16
      %60 = vsyncadd [#allocation8], %s59
      %s62 = sshll.u32 %s4, 4
      %s63 = int_to_ptr.vmem [resolvable:$true] %s62
      %65 = dma.vmem_to_smem %s63, 16, [#allocation9], [#allocation8]
    $region21: #{controller_forward.1} parent=1 // pred_fallthru
      _
    // Predicated region
    $region22: #{controller_forward.1} parent=1 // pred_check
      _
    $region23: #{controller_forward.1} parent=1 // pred_check_branch
      %67 = sbr.rel (0) target = $region25
    $region24: #{controller_forward.1} parent=1 // pred_region
      %s69 = ssub.s32 16, 16
      %70 = vsyncadd [#allocation11], %s69
      %s72 = sshll.u32 %s5, 4
      %s73 = int_to_ptr.vmem [resolvable:$true] %s72
      %75 = dma.vmem_to_smem %s73, 16, [#allocation10], [#allocation11]
    $region25: #{controller_forward.1} parent=1 // pred_fallthru
      _
    // Predicated region
    $region26: #{controller_forward.1} parent=1 // pred_check
      _
    $region27: #{controller_forward.1} parent=1 // pred_check_branch
      %77 = sbr.rel (0) target = $region29
    $region28: #{controller_forward.1} parent=1 // pred_region
      _
    $region29: #{controller_forward.1} parent=1 // pred_fallthru
      _
    // Predicated region
    $region30: #{controller_forward.1} parent=1 // pred_check
      _
    $region31: #{controller_forward.1} parent=1 // pred_check_branch
      %79 = sbr.rel (0) target = $region33
    $region32: #{controller_forward.1} parent=1 // pred_region
      %80 = dma.done [#allocation3], 16
    $region33: #{controller_forward.1} parent=1 // pred_fallthru
      _
    // Predicated region
    $region34: #{controller_forward.1} parent=1 // pred_check
      _
    $region35: #{controller_forward.1} parent=1 // pred_check_branch
      %82 = sbr.rel (0) target = $region37
    $region36: #{controller_forward.1} parent=1 // pred_region
      %83 = dma.done [#allocation5], 16
    $region37: #{controller_forward.1} parent=1 // pred_fallthru
      _
    // Predicated region
    $region38: #{controller_forward.1} parent=1 // pred_check
      _
    $region39: #{controller_forward.1} parent=1 // pred_check_branch
      %85 = sbr.rel (0) target = $region41
    $region40: #{controller_forward.1} parent=1 // pred_region
      %86 = dma.done [#allocation5], 16
    $region41: #{controller_forward.1} parent=1 // pred_fallthru
      _
    // Predicated region
    $region42: #{controller_forward.1} parent=1 // pred_check
      _
    $region43: #{controller_forward.1} parent=1 // pred_check_branch
      %88 = sbr.rel (0) target = $region45
    $region44: #{controller_forward.1} parent=1 // pred_region
      %89 = dma.done [#allocation8], 16
    $region45: #{controller_forward.1} parent=1 // pred_fallthru
      _
    // Predicated region
    $region46: #{controller_forward.1} parent=1 // pred_check
      _
    $region47: #{controller_forward.1} parent=1 // pred_check_branch
      %91 = sbr.rel (0) target = $region49
    $region48: #{controller_forward.1} parent=1 // pred_region
      %92 = dma.done [#allocation8], 16
    $region49: #{controller_forward.1} parent=1 // pred_fallthru
      _
    // Predicated region
    $region50: #{controller_forward.1} parent=1 // pred_check
      _
    $region51: #{controller_forward.1} parent=1 // pred_check_branch
      %94 = sbr.rel (0) target = $region53
    $region52: #{controller_forward.1} parent=1 // pred_region
      %95 = dma.done [#allocation11], 16
    $region53: #{controller_forward.1} parent=1 // pred_fallthru
      _
    %96 = sfence
    %v97 = vld [vmem:[%s6] sm:$0x1f]
    %s98 = sld [smem:[#allocation2]]
    %v99 = vstv %s98
    %v100 = vmul.f32 %v97, %v99
    %s101 = sld [smem:[#allocation2 + $0x6]]
    %v102 = vstv %s101
    %v103 = vmul.f32 %v97, %v102
    %v105 = vrot.slane %v103, 1
    %v107 = vadd.f32 %v100, %v105
    %s108 = sld [smem:[#allocation2 + $0xc]]
    %v109 = vstv %s108
    %v110 = vmul.f32 %v97, %v109
    %v112 = vrot.slane %v110, 2
    %v114 = vadd.f32 %v107, %v112
    %s115 = sld [smem:[#allocation2 + $0x12]]
    %v116 = vstv %s115
    %v117 = vmul.f32 %v97, %v116
    %v119 = vrot.slane %v117, 3
    %v121 = vadd.f32 %v114, %v119
    %s122 = sld [smem:[#allocation2 + $0x18]]
    %v123 = vstv %s122
    %v124 = vmul.f32 %v97, %v123
    %v126 = vrot.slane %v124, 4
    %v128 = vadd.f32 %v121, %v126
    %s129 = sld [smem:[#allocation4]]
    %v130 = vstv %s129
    %v131 = vadd.f32 %v128, %v130
    %v132 = vtanh.pop %v131
    %s133 = sld [smem:[#allocation2 + $0x1]]
    %v134 = vstv %s133
    %v135 = vmul.f32 %v97, %v134
    %s136 = sld [smem:[#allocation2 + $0x7]]
    %v137 = vstv %s136
    %v138 = vmul.f32 %v97, %v137
    %v140 = vrot.slane %v138, 1
    %v142 = vadd.f32 %v135, %v140
    %s143 = sld [smem:[#allocation2 + $0xd]]
    %v144 = vstv %s143
    %v145 = vmul.f32 %v97, %v144
    %v147 = vrot.slane %v145, 2
    %v149 = vadd.f32 %v142, %v147
    %s150 = sld [smem:[#allocation2 + $0x13]]
    %v151 = vstv %s150
    %v152 = vmul.f32 %v97, %v151
    %v154 = vrot.slane %v152, 3
    %v156 = vadd.f32 %v149, %v154
    %s157 = sld [smem:[#allocation2 + $0x19]]
    %v158 = vstv %s157
    %v159 = vmul.f32 %v97, %v158
    %v161 = vrot.slane %v159, 4
    %v163 = vadd.f32 %v156, %v161
    %s164 = sld [smem:[#allocation4 + $0x1]]
    %v165 = vstv %s164
    %v166 = vadd.f32 %v163, %v165
    %v167 = vtanh.pop %v166
    %s168 = sld [smem:[#allocation2 + $0x2]]
    %v169 = vstv %s168
    %v170 = vmul.f32 %v97, %v169
    %s171 = sld [smem:[#allocation2 + $0x8]]
    %v172 = vstv %s171
    %v173 = vmul.f32 %v97, %v172
    %v175 = vrot.slane %v173, 1
    %v177 = vadd.f32 %v170, %v175
    %s178 = sld [smem:[#allocation2 + $0xe]]
    %v179 = vstv %s178
    %v180 = vmul.f32 %v97, %v179
    %v182 = vrot.slane %v180, 2
    %v184 = vadd.f32 %v177, %v182
    %s185 = sld [smem:[#allocation2 + $0x14]]
    %v186 = vstv %s185
    %v187 = vmul.f32 %v97, %v186
    %v189 = vrot.slane %v187, 3
    %v191 = vadd.f32 %v184, %v189
    %s192 = sld [smem:[#allocation2 + $0x1a]]
    %v193 = vstv %s192
    %v194 = vmul.f32 %v97, %v193
    %v196 = vrot.slane %v194, 4
    %v198 = vadd.f32 %v191, %v196
    %s199 = sld [smem:[#allocation4 + $0x2]]
    %v200 = vstv %s199
    %v201 = vadd.f32 %v198, %v200
    %v202 = vtanh.pop %v201
    %s203 = sld [smem:[#allocation2 + $0x3]]
    %v204 = vstv %s203
    %v205 = vmul.f32 %v97, %v204
    %s206 = sld [smem:[#allocation2 + $0x9]]
    %v207 = vstv %s206
    %v208 = vmul.f32 %v97, %v207
    %v210 = vrot.slane %v208, 1
    %v212 = vadd.f32 %v205, %v210
    %s213 = sld [smem:[#allocation2 + $0xf]]
    %v214 = vstv %s213
    %v215 = vmul.f32 %v97, %v214
    %v217 = vrot.slane %v215, 2
    %v219 = vadd.f32 %v212, %v217
    %s220 = sld [smem:[#allocation2 + $0x15]]
    %v221 = vstv %s220
    %v222 = vmul.f32 %v97, %v221
    %v224 = vrot.slane %v222, 3
    %v226 = vadd.f32 %v219, %v224
    %s227 = sld [smem:[#allocation2 + $0x1b]]
    %v228 = vstv %s227
    %v229 = vmul.f32 %v97, %v228
    %v231 = vrot.slane %v229, 4
    %v233 = vadd.f32 %v226, %v231
    %s234 = sld [smem:[#allocation4 + $0x3]]
    %v235 = vstv %s234
    %v236 = vadd.f32 %v233, %v235
    %v237 = vtanh.pop %v236
    %s238 = sld [smem:[#allocation2 + $0x4]]
    %v239 = vstv %s238
    %v240 = vmul.f32 %v97, %v239
    %s241 = sld [smem:[#allocation2 + $0xa]]
    %v242 = vstv %s241
    %v243 = vmul.f32 %v97, %v242
    %v245 = vrot.slane %v243, 1
    %v247 = vadd.f32 %v240, %v245
    %s248 = sld [smem:[#allocation2 + $0x10]]
    %v249 = vstv %s248
    %v250 = vmul.f32 %v97, %v249
    %v252 = vrot.slane %v250, 2
    %v254 = vadd.f32 %v247, %v252
    %s255 = sld [smem:[#allocation2 + $0x16]]
    %v256 = vstv %s255
    %v257 = vmul.f32 %v97, %v256
    %v259 = vrot.slane %v257, 3
    %v261 = vadd.f32 %v254, %v259
    %s262 = sld [smem:[#allocation2 + $0x1c]]
    %v263 = vstv %s262
    %v264 = vmul.f32 %v97, %v263
    %v266 = vrot.slane %v264, 4
    %v268 = vadd.f32 %v261, %v266
    %s269 = sld [smem:[#allocation4 + $0x4]]
    %v270 = vstv %s269
    %v271 = vadd.f32 %v268, %v270
    %v272 = vtanh.pop %v271
    %s273 = sld [smem:[#allocation2 + $0x5]]
    %v274 = vstv %s273
    %v275 = vmul.f32 %v97, %v274
    %s276 = sld [smem:[#allocation2 + $0xb]]
    %v277 = vstv %s276
    %v278 = vmul.f32 %v97, %v277
    %v280 = vrot.slane %v278, 1
    %v282 = vadd.f32 %v275, %v280
    %s283 = sld [smem:[#allocation2 + $0x11]]
    %v284 = vstv %s283
    %v285 = vmul.f32 %v97, %v284
    %v287 = vrot.slane %v285, 2
    %v289 = vadd.f32 %v282, %v287
    %s290 = sld [smem:[#allocation2 + $0x17]]
    %v291 = vstv %s290
    %v292 = vmul.f32 %v97, %v291
    %v294 = vrot.slane %v292, 3
    %v296 = vadd.f32 %v289, %v294
    %s297 = sld [smem:[#allocation2 + $0x1d]]
    %v298 = vstv %s297
    %v299 = vmul.f32 %v97, %v298
    %v301 = vrot.slane %v299, 4
    %v303 = vadd.f32 %v296, %v301
    %s304 = sld [smem:[#allocation4 + $0x5]]
    %v305 = vstv %s304
    %v306 = vadd.f32 %v303, %v305
    %v307 = vtanh.pop %v306
    %s308 = sld [smem:[#allocation6]]
    %v309 = vstv %s308
    %v310 = vmul.f32 %v132, %v309
    %s311 = sld [smem:[#allocation6 + $0x6]]
    %v312 = vstv %s311
    %v313 = vmul.f32 %v167, %v312
    %v314 = vadd.f32 %v310, %v313
    %s315 = sld [smem:[#allocation6 + $0xc]]
    %v316 = vstv %s315
    %v317 = vmul.f32 %v202, %v316
    %v318 = vadd.f32 %v314, %v317
    %s319 = sld [smem:[#allocation6 + $0x12]]
    %v320 = vstv %s319
    %v321 = vmul.f32 %v237, %v320
    %v322 = vadd.f32 %v318, %v321
    %s323 = sld [smem:[#allocation6 + $0x18]]
    %v324 = vstv %s323
    %v325 = vmul.f32 %v272, %v324
    %v326 = vadd.f32 %v322, %v325
    %s327 = sld [smem:[#allocation6 + $0x1e]]
    %v328 = vstv %s327
    %v329 = vmul.f32 %v307, %v328
    %v330 = vadd.f32 %v326, %v329
    %s331 = sld [smem:[#allocation7]]
    %v332 = vstv %s331
    %v333 = vadd.f32 %v330, %v332
    %v334 = vtanh.pop %v333
    %s335 = sld [smem:[#allocation6 + $0x1]]
    %v336 = vstv %s335
    %v337 = vmul.f32 %v132, %v336
    %s338 = sld [smem:[#allocation6 + $0x7]]
    %v339 = vstv %s338
    %v340 = vmul.f32 %v167, %v339
    %v341 = vadd.f32 %v337, %v340
    %s342 = sld [smem:[#allocation6 + $0xd]]
    %v343 = vstv %s342
    %v344 = vmul.f32 %v202, %v343
    %v345 = vadd.f32 %v341, %v344
    %s346 = sld [smem:[#allocation6 + $0x13]]
    %v347 = vstv %s346
    %v348 = vmul.f32 %v237, %v347
    %v349 = vadd.f32 %v345, %v348
    %s350 = sld [smem:[#allocation6 + $0x19]]
    %v351 = vstv %s350
    %v352 = vmul.f32 %v272, %v351
    %v353 = vadd.f32 %v349, %v352
    %s354 = sld [smem:[#allocation6 + $0x1f]]
    %v355 = vstv %s354
    %v356 = vmul.f32 %v307, %v355
    %v357 = vadd.f32 %v353, %v356
    %s358 = sld [smem:[#allocation7 + $0x1]]
    %v359 = vstv %s358
    %v360 = vadd.f32 %v357, %v359
    %v361 = vtanh.pop %v360
    %s362 = sld [smem:[#allocation6 + $0x2]]
    %v363 = vstv %s362
    %v364 = vmul.f32 %v132, %v363
    %s365 = sld [smem:[#allocation6 + $0x8]]
    %v366 = vstv %s365
    %v367 = vmul.f32 %v167, %v366
    %v368 = vadd.f32 %v364, %v367
    %s369 = sld [smem:[#allocation6 + $0xe]]
    %v370 = vstv %s369
    %v371 = vmul.f32 %v202, %v370
    %v372 = vadd.f32 %v368, %v371
    %s373 = sld [smem:[#allocation6 + $0x14]]
    %v374 = vstv %s373
    %v375 = vmul.f32 %v237, %v374
    %v376 = vadd.f32 %v372, %v375
    %s377 = sld [smem:[#allocation6 + $0x1a]]
    %v378 = vstv %s377
    %v379 = vmul.f32 %v272, %v378
    %v380 = vadd.f32 %v376, %v379
    %s381 = sld [smem:[#allocation6 + $0x20]]
    %v382 = vstv %s381
    %v383 = vmul.f32 %v307, %v382
    %v384 = vadd.f32 %v380, %v383
    %s385 = sld [smem:[#allocation7 + $0x2]]
    %v386 = vstv %s385
    %v387 = vadd.f32 %v384, %v386
    %v388 = vtanh.pop %v387
    %s389 = sld [smem:[#allocation6 + $0x3]]
    %v390 = vstv %s389
    %v391 = vmul.f32 %v132, %v390
    %s392 = sld [smem:[#allocation6 + $0x9]]
    %v393 = vstv %s392
    %v394 = vmul.f32 %v167, %v393
    %v395 = vadd.f32 %v391, %v394
    %s396 = sld [smem:[#allocation6 + $0xf]]
    %v397 = vstv %s396
    %v398 = vmul.f32 %v202, %v397
    %v399 = vadd.f32 %v395, %v398
    %s400 = sld [smem:[#allocation6 + $0x15]]
    %v401 = vstv %s400
    %v402 = vmul.f32 %v237, %v401
    %v403 = vadd.f32 %v399, %v402
    %s404 = sld [smem:[#allocation6 + $0x1b]]
    %v405 = vstv %s404
    %v406 = vmul.f32 %v272, %v405
    %v407 = vadd.f32 %v403, %v406
    %s408 = sld [smem:[#allocation6 + $0x21]]
    %v409 = vstv %s408
    %v410 = vmul.f32 %v307, %v409
    %v411 = vadd.f32 %v407, %v410
    %s412 = sld [smem:[#allocation7 + $0x3]]
    %v413 = vstv %s412
    %v414 = vadd.f32 %v411, %v413
    %v415 = vtanh.pop %v414
    %s416 = sld [smem:[#allocation6 + $0x4]]
    %v417 = vstv %s416
    %v418 = vmul.f32 %v132, %v417
    %s419 = sld [smem:[#allocation6 + $0xa]]
    %v420 = vstv %s419
    %v421 = vmul.f32 %v167, %v420
    %v422 = vadd.f32 %v418, %v421
    %s423 = sld [smem:[#allocation6 + $0x10]]
    %v424 = vstv %s423
    %v425 = vmul.f32 %v202, %v424
    %v426 = vadd.f32 %v422, %v425
    %s427 = sld [smem:[#allocation6 + $0x16]]
    %v428 = vstv %s427
    %v429 = vmul.f32 %v237, %v428
    %v430 = vadd.f32 %v426, %v429
    %s431 = sld [smem:[#allocation6 + $0x1c]]
    %v432 = vstv %s431
    %v433 = vmul.f32 %v272, %v432
    %v434 = vadd.f32 %v430, %v433
    %s435 = sld [smem:[#allocation6 + $0x22]]
    %v436 = vstv %s435
    %v437 = vmul.f32 %v307, %v436
    %v438 = vadd.f32 %v434, %v437
    %s439 = sld [smem:[#allocation7 + $0x4]]
    %v440 = vstv %s439
    %v441 = vadd.f32 %v438, %v440
    %v442 = vtanh.pop %v441
    %s443 = sld [smem:[#allocation6 + $0x5]]
    %v444 = vstv %s443
    %v445 = vmul.f32 %v132, %v444
    %s446 = sld [smem:[#allocation6 + $0xb]]
    %v447 = vstv %s446
    %v448 = vmul.f32 %v167, %v447
    %v449 = vadd.f32 %v445, %v448
    %s450 = sld [smem:[#allocation6 + $0x11]]
    %v451 = vstv %s450
    %v452 = vmul.f32 %v202, %v451
    %v453 = vadd.f32 %v449, %v452
    %s454 = sld [smem:[#allocation6 + $0x17]]
    %v455 = vstv %s454
    %v456 = vmul.f32 %v237, %v455
    %v457 = vadd.f32 %v453, %v456
    %s458 = sld [smem:[#allocation6 + $0x1d]]
    %v459 = vstv %s458
    %v460 = vmul.f32 %v272, %v459
    %v461 = vadd.f32 %v457, %v460
    %s462 = sld [smem:[#allocation6 + $0x23]]
    %v463 = vstv %s462
    %v464 = vmul.f32 %v307, %v463
    %v465 = vadd.f32 %v461, %v464
    %s466 = sld [smem:[#allocation7 + $0x5]]
    %v467 = vstv %s466
    %v468 = vadd.f32 %v465, %v467
    %v469 = vtanh.pop %v468
    %s470 = sld [smem:[#allocation9]]
    %v471 = vstv %s470
    %v472 = vmul.f32 %v334, %v471
    %s473 = sld [smem:[#allocation9 + $0x3]]
    %v474 = vstv %s473
    %v475 = vmul.f32 %v361, %v474
    %v476 = vadd.f32 %v472, %v475
    %s477 = sld [smem:[#allocation9 + $0x6]]
    %v478 = vstv %s477
    %v479 = vmul.f32 %v388, %v478
    %v480 = vadd.f32 %v476, %v479
    %s481 = sld [smem:[#allocation9 + $0x9]]
    %v482 = vstv %s481
    %v483 = vmul.f32 %v415, %v482
    %v484 = vadd.f32 %v480, %v483
    %s485 = sld [smem:[#allocation9 + $0xc]]
    %v486 = vstv %s485
    %v487 = vmul.f32 %v442, %v486
    %v488 = vadd.f32 %v484, %v487
    %s489 = sld [smem:[#allocation9 + $0xf]]
    %v490 = vstv %s489
    %v491 = vmul.f32 %v469, %v490
    %v492 = vadd.f32 %v488, %v491
    %s493 = sld [smem:[#allocation10]]
    %v494 = vstv %s493
    %v495 = vadd.f32 %v492, %v494
    %v496 = vtanh.pop %v495
    %s497 = sld [smem:[#allocation9 + $0x1]]
    %v498 = vstv %s497
    %v499 = vmul.f32 %v334, %v498
    %s500 = sld [smem:[#allocation9 + $0x4]]
    %v501 = vstv %s500
    %v502 = vmul.f32 %v361, %v501
    %v503 = vadd.f32 %v499, %v502
    %s504 = sld [smem:[#allocation9 + $0x7]]
    %v505 = vstv %s504
    %v506 = vmul.f32 %v388, %v505
    %v507 = vadd.f32 %v503, %v506
    %s508 = sld [smem:[#allocation9 + $0xa]]
    %v509 = vstv %s508
    %v510 = vmul.f32 %v415, %v509
    %v511 = vadd.f32 %v507, %v510
    %s512 = sld [smem:[#allocation9 + $0xd]]
    %v513 = vstv %s512
    %v514 = vmul.f32 %v442, %v513
    %v515 = vadd.f32 %v511, %v514
    %s516 = sld [smem:[#allocation9 + $0x10]]
    %v517 = vstv %s516
    %v518 = vmul.f32 %v469, %v517
    %v519 = vadd.f32 %v515, %v518
    %s520 = sld [smem:[#allocation10 + $0x1]]
    %v521 = vstv %s520
    %v522 = vadd.f32 %v519, %v521
    %v523 = vtanh.pop %v522
    %s524 = sld [smem:[#allocation9 + $0x2]]
    %v525 = vstv %s524
    %v526 = vmul.f32 %v334, %v525
    %s527 = sld [smem:[#allocation9 + $0x5]]
    %v528 = vstv %s527
    %v529 = vmul.f32 %v361, %v528
    %v530 = vadd.f32 %v526, %v529
    %s531 = sld [smem:[#allocation9 + $0x8]]
    %v532 = vstv %s531
    %v533 = vmul.f32 %v388, %v532
    %v534 = vadd.f32 %v530, %v533
    %s535 = sld [smem:[#allocation9 + $0xb]]
    %v536 = vstv %s535
    %v537 = vmul.f32 %v415, %v536
    %v538 = vadd.f32 %v534, %v537
    %s539 = sld [smem:[#allocation9 + $0xe]]
    %v540 = vstv %s539
    %v541 = vmul.f32 %v442, %v540
    %v542 = vadd.f32 %v538, %v541
    %s543 = sld [smem:[#allocation9 + $0x11]]
    %v544 = vstv %s543
    %v545 = vmul.f32 %v469, %v544
    %v546 = vadd.f32 %v542, %v545
    %s547 = sld [smem:[#allocation10 + $0x2]]
    %v548 = vstv %s547
    %v549 = vadd.f32 %v546, %v548
    %v550 = vtanh.pop %v549
    %v552 = vrot.slane %v523, 7
    %v555 = vrot.slane %v550, 6
    %vm557 = vcmask 1040384
    %v558 = vsel %vm557, %v496, %v552
    %vm559 = vcmask 1041408
    %v560 = vsel %vm559, %v558, %v555
    %561 = vst [vmem:[%s7] sm:$0x7] %v560
    // Predicated region
    $region54: #{controller_forward.1} parent=1 // pred_check
      _
    $region55: #{controller_forward.1} parent=1 // pred_check_branch
      %563 = sbr.rel (0) target = $region57
    $region56: #{controller_forward.1} parent=1 // pred_region
      _
    $region57: #{controller_forward.1} parent=1 // pred_fallthru
      _
    // Predicated region
    $region58: #{controller_forward.1} parent=1 // pred_check
      _
    $region59: #{controller_forward.1} parent=1 // pred_check_branch
      %565 = sbr.rel (0) target = $region61
    $region60: #{controller_forward.1} parent=1 // pred_region
      _
    $region61: #{controller_forward.1} parent=1 // pred_fallthru
      _
    %566 = vsyncpa [#allocation3], 1
    %567 = vsyncpa [#allocation5], 1
    %568 = vsyncpa [#allocation8], 1
    %569 = vsyncpa [#allocation11], 1

</llo_original>
